<compile_context>
chip_gen: v6e
topology: v6e:2x2x1
jax: 0.10.0
libtpu: 0.0.40
codegen_flags: <defaults>
</compile_context>

<pallas_src>
import functools

import jax
import jax.numpy as jnp
from jax.experimental import pallas as pl
from jax.experimental.pallas import tpu as pltpu


def _round_up(x, m):
    return (x + m - 1) // m * m


# --------------------------------------------------------------------------- kernel
def _patch_embed_kernel(x_ref, w_ref, b_ref, g_ref, beta_ref, o_ref,
                        *, eps, use_norm, e_true):
    # x_ref:    (TN, K)      bf16 patch rows
    # w_ref:    (K, E_pad)   bf16 projection weight (zero-padded cols beyond E)
    # b_ref:    (1, E_pad)   f32 conv bias   (zero-padded)
    # g_ref:    (1, E_pad)   f32 LN gamma    (zero-padded)
    # beta_ref: (1, E_pad)   f32 LN beta     (zero-padded)
    # o_ref:    (TN, E_pad)  bf16 output (lane-dense, multiple of 128 wide)
    y = jnp.dot(x_ref[...], w_ref[...], preferred_element_type=jnp.float32)
    y = y + b_ref[...]
    if use_norm:
        # Padded E lanes of y are exactly zero (zero weight cols + zero bias),
        # so one-pass sums over E_pad equal the sums over the true E.
        inv_e = 1.0 / e_true
        s = jnp.sum(y, axis=-1, keepdims=True)
        s2 = jnp.sum(y * y, axis=-1, keepdims=True)
        mean = s * inv_e
        # Clamp: f32 cancellation can push E[y^2]-mean^2 slightly negative.
        var = jnp.maximum(s2 * inv_e - mean * mean, 0.0)
        y = (y - mean) * jax.lax.rsqrt(var + eps)
        y = y * g_ref[...] + beta_ref[...]      # padded lanes -> 0 (gamma=beta=0)
    o_ref[...] = y.astype(o_ref.dtype)


# --------------------------------------------------------------------------- tiling helpers
def _vmem_budget_bytes():
    """Generation-aware VMEM budget, consistent with vmem_limit_bytes."""
    try:
        phys = int(pltpu.get_tpu_info().vmem_capacity_bytes)
    except Exception:
        phys = 64 * 1024 * 1024
    if phys <= 64 * 1024 * 1024:      # v7x: 64 MiB physical per TensorCore
        return 36 * 1024 * 1024
    return 96 * 1024 * 1024           # v5e / v6e: 128 MiB physical


def _pick_tile_rows(n, cap):
    """Largest divisor of n that is a multiple of 8 and <= cap, preferring an
    even number of grid steps >= 2 (v7x has two TensorCores)."""
    best = None
    best_even = None
    d = 8
    limit = min(n, cap)
    while d <= limit:
        if n % d == 0:
            best = d
            if (n // d) % 2 == 0:
                best_even = d
        d += 8
    return best_even if best_even is not None else best


# --------------------------------------------------------------------------- wrapper
def patch_embed_forward(x, w, b, gamma, beta, *, patch_size, use_norm=True,
                        eps=1e-5, max_tile_rows=4096, out_dtype=jnp.bfloat16,
                        nchw_output=False, trim_embed=False):
    """PatchEmbed forward.

    x: (B, C, H, W) f32 NCHW.  w: (E, C, ph, pw).  b / gamma / beta: (E,).

    Default (fast) output: (B, Hp, Wp, E_pad) in `out_dtype` — NHWC with the
    embed dim zero-padded to a multiple of 128; padded lanes are exactly 0.
    nchw_output=True / trim_embed=True give the PyTorch-identical layout at the
    cost of extra XLA passes (non-lane-aligned slice and/or NCHW transpose).
    """
    B, C, H, W = x.shape
    E = w.shape[0]
    ph, pw = patch_size

    # Same padding semantics as the PyTorch module (pad right / bottom).
    if W % pw != 0:
        x = jnp.pad(x, ((0, 0), (0, 0), (0, 0), (0, pw - W % pw)))
    if H % ph != 0:
        x = jnp.pad(x, ((0, 0), (0, 0), (0, ph - H % ph), (0, 0)))
    _, _, Hpad, Wpad = x.shape
    Hp, Wp = Hpad // ph, Wpad // pw

    # im2col in one fused XLA pass (read f32 x, write bf16 patches).
    # Column order (C, ph, pw) matches the PyTorch Conv2d weight flatten.
    # TODO(synk): see header — fusing this into the kernel needs a Mosaic
    #   lane-splitting relayout; deliberately left in XLA for robustness.
    patches = x.reshape(B, C, Hp, ph, Wp, pw)
    patches = jnp.transpose(patches, (0, 2, 4, 1, 3, 5))        # (B,Hp,Wp,C,ph,pw)
    K = C * ph * pw
    N = B * Hp * Wp
    patches = patches.reshape(N, K).astype(jnp.bfloat16)

    # ---- tiling ---------------------------------------------------------------
    E_pad = _round_up(E, 128)                                   # lane-dense output
    out_bytes = jnp.dtype(out_dtype).itemsize
    budget = _vmem_budget_bytes()

    def _vmem_bytes(tn):
        return (2 * tn * K * 2                 # patch tile (bf16, double-buffered)
                + 2 * K * E_pad * 2            # weight (bf16, conservatively x2)
                + 2 * tn * E_pad * out_bytes   # output tile (double-buffered)
                + 3 * 2 * E_pad * 4            # bias / gamma / beta rows
                + (2 << 20))                   # slack for internal scratch

    cap = max(8, _round_up(int(max_tile_rows), 8))
    while cap > 64 and _vmem_bytes(cap) > budget:
        cap = max(64, _round_up(cap // 2, 8))

    tile_n = _pick_tile_rows(N, cap)
    if tile_n is None:                          # no multiple-of-8 divisor <= cap
        tile_n = min(cap, max(8, _round_up(N, 8)))
    N_pad = _round_up(N, tile_n)
    if N_pad != N:                              # only when N has no good divisor
        patches = jnp.pad(patches, ((0, N_pad - N), (0, 0)))

    # ---- parameters (embed dim zero-padded to E_pad) --------------------------
    w_mat = w.reshape(E, K).T.astype(jnp.bfloat16)              # (K, E)
    w_mat = jnp.pad(w_mat, ((0, 0), (0, E_pad - E)))            # (K, E_pad)

    def _row(v):
        return jnp.pad(v.reshape(1, E).astype(jnp.float32),
                       ((0, 0), (0, E_pad - E)))

    b_row, g_row, beta_row = _row(b), _row(gamma), _row(beta)

    kernel = functools.partial(_patch_embed_kernel, eps=eps,
                               use_norm=use_norm, e_true=float(E))

    cost = pl.CostEstimate(
        flops=2 * N_pad * K * E_pad,
        transcendentals=N_pad if use_norm else 0,
        bytes_accessed=(N_pad * K * 2 + K * E_pad * 2
                        + N_pad * E_pad * out_bytes + 3 * E_pad * 4),
    )

    out = pl.pallas_call(
        kernel,
        out_shape=jax.ShapeDtypeStruct((N_pad, E_pad), out_dtype),
        grid_spec=pltpu.PrefetchScalarGridSpec(
            num_scalar_prefetch=0,
            grid=(N_pad // tile_n,),
            in_specs=[
                pl.BlockSpec((tile_n, K), lambda i: (i, 0)),
                # Grid-invariant parameters (weight ~K*E_pad bf16, tiny rows).
                pl.BlockSpec((K, E_pad), lambda i: (0, 0)),
                pl.BlockSpec((1, E_pad), lambda i: (0, 0)),
                pl.BlockSpec((1, E_pad), lambda i: (0, 0)),
                pl.BlockSpec((1, E_pad), lambda i: (0, 0)),
            ],
            out_specs=pl.BlockSpec((tile_n, E_pad), lambda i: (i, 0)),
        ),
        compiler_params=pltpu.CompilerParams(
            dimension_semantics=("parallel",),
            vmem_limit_bytes=budget,            # consistent with the Python clamp
        ),
        cost_estimate=cost,
    )(patches, w_mat, b_row, g_row, beta_row)

    if N_pad != N:
        out = out[:N]
    out = out.reshape(B, Hp, Wp, E_pad)         # free reshape (row-major dim split)
    if trim_embed or nchw_output:
        out = out[..., :E]                      # non-lane-aligned slice: extra pass
    if nchw_output:
        out = jnp.transpose(out, (0, 3, 1, 2))  # PyTorch NCHW layout: extra pass
    return out


# --------------------------------------------------------------------------- reference
def _reference_forward(x, w, b, gamma, beta, *, patch_size, use_norm, eps=1e-5):
    """Plain-JAX f32 reference matching the PyTorch module semantics (NCHW out)."""
    B, C, H, W = x.shape
    E = w.shape[0]
    ph, pw = patch_size
    if W % pw != 0:
        x = jnp.pad(x, ((0, 0), (0, 0), (0, 0), (0, pw - W % pw)))
    if H % ph != 0:
        x = jnp.pad(x, ((0, 0), (0, 0), (0, ph - H % ph), (0, 0)))
    _, _, Hpad, Wpad = x.shape
    Hp, Wp = Hpad // ph, Wpad // pw
    p = x.reshape(B, C, Hp, ph, Wp, pw).transpose(0, 2, 4, 1, 3, 5)
    p = p.reshape(B * Hp * Wp, C * ph * pw)
    y = p @ w.reshape(E, -1).T + b[None, :]
    if use_norm:
        mean = jnp.mean(y, axis=-1, keepdims=True)
        var = jnp.mean((y - mean) ** 2, axis=-1, keepdims=True)
        y = (y - mean) * jax.lax.rsqrt(var + eps)
        y = y * gamma[None, :] + beta[None, :]
    y = y.reshape(B, Hp, Wp, E)
    return jnp.transpose(y, (0, 3, 1, 2))


if __name__ == "__main__":
    # Small deterministic example (module defaults: patch_size=4, norm=LayerNorm).
    patch_size = (4, 4)
    in_chans = 4
    embed_dim = 96
    B, H, W = 2, 16, 16

    key = jax.random.PRNGKey(0)
    kx, kw, kb = jax.random.split(key, 3)
    x = jax.random.normal(kx, (B, in_chans, H, W), dtype=jnp.float32)
    w = jax.random.normal(kw, (embed_dim, in_chans, *patch_size),
                          dtype=jnp.float32) * 0.05
    b = jax.random.normal(kb, (embed_dim,), dtype=jnp.float32) * 0.01
    gamma = jnp.ones((embed_dim,), dtype=jnp.float32)
    beta = jnp.zeros((embed_dim,), dtype=jnp.float32)

    Hp, Wp = H // patch_size[0], W // patch_size[1]
    E_pad = _round_up(embed_dim, 128)

    # Fast path: bf16 NHWC output with lane-padded embed dim, no post-kernel passes.
    out = patch_embed_forward(x, w, b, gamma, beta,
                              patch_size=patch_size, use_norm=True)
    out = jax.block_until_ready(out)
    assert out.shape == (B, Hp, Wp, E_pad), out.shape
    assert out.dtype == jnp.bfloat16, out.dtype
    assert bool(jnp.all(jnp.isfinite(out.astype(jnp.float32))))
    # Padded embed lanes must be exactly zero (gamma/beta/weight-cols zero-padded).
    assert bool(jnp.all(out[..., embed_dim:] == 0))

    # Compare against the f32 reference (module NCHW layout) — conversion here is
    # test-only; the production consumer uses the NHWC/E_pad output directly.
    out_nchw = jnp.transpose(out[..., :embed_dim].astype(jnp.float32),
                             (0, 3, 1, 2))
    ref = _reference_forward(x, w, b, gamma, beta,
                             patch_size=patch_size, use_norm=True)
    max_diff = float(jnp.max(jnp.abs(out_nchw - ref)))
    assert max_diff < 0.15, f"max diff too large: {max_diff}"

    print("KERNEL_OK")
</pallas_src>

<mosaic_0001>
module attributes {stable_mosaic.version = 11 : i64} {
  func.func @_patch_embed_kernel(%arg0: i32, %arg1: memref<16x64xbf16, #tpu.memory_space<vmem>>, %arg2: memref<64x128xbf16, #tpu.memory_space<vmem>>, %arg3: memref<1x128xf32, #tpu.memory_space<vmem>>, %arg4: memref<1x128xf32, #tpu.memory_space<vmem>>, %arg5: memref<1x128xf32, #tpu.memory_space<vmem>>, %arg6: memref<16x128xbf16, #tpu.memory_space<vmem>>) attributes {dimension_semantics = [#tpu.dimension_semantics<parallel>], iteration_bounds = array<i64: 2>, scalar_prefetch = 0 : i64, scratch_operands = 0 : i64, tpu.core_type = #tpu.core_type<tc>, window_params = [{transform_indices = @transform_0, window_bounds = array<i64: 16, 64>}, {pipeline_mode = #tpu.pipeline_mode<synchronous>, transform_indices = @transform_1, window_bounds = array<i64: 64, 128>}, {pipeline_mode = #tpu.pipeline_mode<synchronous>, transform_indices = @transform_2, window_bounds = array<i64: 1, 128>}, {pipeline_mode = #tpu.pipeline_mode<synchronous>, transform_indices = @transform_3, window_bounds = array<i64: 1, 128>}, {pipeline_mode = #tpu.pipeline_mode<synchronous>, transform_indices = @transform_4, window_bounds = array<i64: 1, 128>}, {transform_indices = @transform_5, window_bounds = array<i64: 16, 128>}]} {
    %c0 = arith.constant 0 : index
    %c0_0 = arith.constant 0 : index
    %0 = vector.load %arg1[%c0, %c0_0] : memref<16x64xbf16, #tpu.memory_space<vmem>>, vector<16x64xbf16>
    %c0_1 = arith.constant 0 : index
    %c0_2 = arith.constant 0 : index
    %1 = vector.load %arg2[%c0_1, %c0_2] : memref<64x128xbf16, #tpu.memory_space<vmem>>, vector<64x128xbf16>
    %cst = arith.constant dense<0.000000e+00> : vector<16x128xf32>
    %2 = tpu.matmul %0, %1, %cst {dimension_numbers = #tpu.dot_dimension_numbers<[1], [0], [0], [1], [0, 0, 1, 1], [], []>} : vector<16x64xbf16>, vector<64x128xbf16>, vector<16x128xf32> -> vector<16x128xf32>
    %c0_3 = arith.constant 0 : index
    %c0_4 = arith.constant 0 : index
    %3 = vector.load %arg3[%c0_3, %c0_4] : memref<1x128xf32, #tpu.memory_space<vmem>>, vector<1x128xf32>
    %4 = vector.broadcast %3 : vector<1x128xf32> to vector<16x128xf32>
    %5 = arith.addf %2, %4 : vector<16x128xf32>
    %cst_5 = arith.constant dense<0.000000e+00> : vector<16xf32>
    %6 = vector.multi_reduction <add>, %5, %cst_5 [1] : vector<16x128xf32> to vector<16xf32>
    %7 = vector.shape_cast %6 : vector<16xf32> to vector<16x1xf32>
    %8 = arith.mulf %5, %5 : vector<16x128xf32>
    %cst_6 = arith.constant dense<0.000000e+00> : vector<16xf32>
    %9 = vector.multi_reduction <add>, %8, %cst_6 [1] : vector<16x128xf32> to vector<16xf32>
    %10 = vector.shape_cast %9 : vector<16xf32> to vector<16x1xf32>
    %cst_7 = arith.constant 0.010416667 : f32
    %11 = vector.broadcast %cst_7 : f32 to vector<16x1xf32>
    %12 = arith.mulf %7, %11 : vector<16x1xf32>
    %cst_8 = arith.constant 0.010416667 : f32
    %13 = vector.broadcast %cst_8 : f32 to vector<16x1xf32>
    %14 = arith.mulf %10, %13 : vector<16x1xf32>
    %15 = arith.mulf %12, %12 : vector<16x1xf32>
    %16 = arith.subf %14, %15 : vector<16x1xf32>
    %cst_9 = arith.constant 0.000000e+00 : f32
    %17 = vector.broadcast %cst_9 : f32 to vector<16x1xf32>
    %18 = arith.maximumf %16, %17 : vector<16x1xf32>
    %19 = vector.broadcast %12 : vector<16x1xf32> to vector<16x128xf32>
    %20 = arith.subf %5, %19 : vector<16x128xf32>
    %cst_10 = arith.constant 9.99999974E-6 : f32
    %21 = vector.broadcast %cst_10 : f32 to vector<16x1xf32>
    %22 = arith.addf %18, %21 : vector<16x1xf32>
    %23 = math.rsqrt %22 : vector<16x1xf32>
    %24 = vector.broadcast %23 : vector<16x1xf32> to vector<16x128xf32>
    %25 = arith.mulf %20, %24 : vector<16x128xf32>
    %c0_11 = arith.constant 0 : index
    %c0_12 = arith.constant 0 : index
    %26 = vector.load %arg4[%c0_11, %c0_12] : memref<1x128xf32, #tpu.memory_space<vmem>>, vector<1x128xf32>
    %27 = vector.broadcast %26 : vector<1x128xf32> to vector<16x128xf32>
    %28 = arith.mulf %25, %27 : vector<16x128xf32>
    %c0_13 = arith.constant 0 : index
    %c0_14 = arith.constant 0 : index
    %29 = vector.load %arg5[%c0_13, %c0_14] : memref<1x128xf32, #tpu.memory_space<vmem>>, vector<1x128xf32>
    %30 = vector.broadcast %29 : vector<1x128xf32> to vector<16x128xf32>
    %31 = arith.addf %28, %30 : vector<16x128xf32>
    %32 = arith.truncf %31 : vector<16x128xf32> to vector<16x128xbf16>
    %c0_15 = arith.constant 0 : index
    %c0_16 = arith.constant 0 : index
    %33 = vector.load %arg6[%c0_15, %c0_16] : memref<16x128xbf16, #tpu.memory_space<vmem>>, vector<16x128xbf16>
    tpu.vector_store %arg6[%c0_15, %c0_16], %32 {strides = array<i32>} : memref<16x128xbf16, #tpu.memory_space<vmem>>, vector<16x128xbf16>,
    return
  }
  func.func @transform_0(%arg0: i32) -> (i32, i32) {
    %c0_i32 = arith.constant 0 : i32
    %c0_i32_0 = arith.constant 0 : i32
    return %arg0, %c0_i32 : i32, i32
  }
  func.func @transform_1(%arg0: i32) -> (i32, i32) {
    %c0_i32 = arith.constant 0 : i32
    %c0_i32_0 = arith.constant 0 : i32
    %c0_i32_1 = arith.constant 0 : i32
    return %c0_i32, %c0_i32_0 : i32, i32
  }
  func.func @transform_2(%arg0: i32) -> (i32, i32) {
    %c0_i32 = arith.constant 0 : i32
    %c0_i32_0 = arith.constant 0 : i32
    %c0_i32_1 = arith.constant 0 : i32
    return %c0_i32, %c0_i32_0 : i32, i32
  }
  func.func @transform_3(%arg0: i32) -> (i32, i32) {
    %c0_i32 = arith.constant 0 : i32
    %c0_i32_0 = arith.constant 0 : i32
    %c0_i32_1 = arith.constant 0 : i32
    return %c0_i32, %c0_i32_0 : i32, i32
  }
  func.func @transform_4(%arg0: i32) -> (i32, i32) {
    %c0_i32 = arith.constant 0 : i32
    %c0_i32_0 = arith.constant 0 : i32
    %c0_i32_1 = arith.constant 0 : i32
    return %c0_i32, %c0_i32_0 : i32, i32
  }
  func.func @transform_5(%arg0: i32) -> (i32, i32) {
    %c0_i32 = arith.constant 0 : i32
    %c0_i32_0 = arith.constant 0 : i32
    return %arg0, %c0_i32 : i32, i32
  }
}

</mosaic_0001>

<llo_original>
// kernel: tpu_custom_call.1
$region0: #{tpu_custom_call.1}
  #allocation0 [shape = 'u32[]', space=smem, size = 0x4, offset = 0x4, fixed_abs, tag = 'smem constant byte address 0x4 - core index']
  #allocation1 [shape = 'u32[144,128]{1,0:T(1,128)}', space=vmem, size = 0x12000, scoped, tag = 'internal scratch']
  %s0 = inlined_call_operand.hbm [shape: bf16[32,64], index: 0, kind: input, shape index: {}]
  %s1 = inlined_call_operand.hbm [shape: bf16[64,128], index: 1, kind: input, shape index: {}]
  %s2 = inlined_call_operand.vmem [shape: f32[1,128], index: 2, kind: input, shape index: {}]
  %s3 = inlined_call_operand.vmem [shape: f32[1,128], index: 3, kind: input, shape index: {}]
  %s4 = inlined_call_operand.vmem [shape: f32[1,128], index: 4, kind: input, shape index: {}]
  %s5 = inlined_call_operand.hbm [shape: bf16[32,128], index: 5, kind: output, shape index: {}]
  %s6 = sld [smem:[#allocation0]]
  $region61: #{tpu_custom_call.1} parent=0
    _
  %s8 = ssub.s32 1, %s6
  %s9 = scalar_select 0, %s8, %s6
  $region1: #{tpu_custom_call.1} parent=0
    #allocation2 [shape = 'u8[8192]{0}', space=vmem, size = 0x2000, scoped, tag = 'input window, operand 0']
    #allocation3 [shape = 's32[2]{0}', space=sflag, size = 0x8, scoped, tag = 'scoped memory for tpu_custom_call.1']
    #allocation4 [shape = 's32[2]{0}', space=sflag, size = 0x8, scoped, tag = 'scoped memory for tpu_custom_call.1']
    #allocation5 [shape = 'u8[16384]{0}', space=vmem, size = 0x4000, scoped, tag = 'input window, operand 1, single buffered']
    #allocation6 [shape = 's32[1]{0}', space=sflag, size = 0x4, scoped, tag = 'scoped memory for tpu_custom_call.1']
    #allocation7 [shape = 'u8[8192]{0}', space=vmem, size = 0x2000, scoped, tag = 'output window, operand 0']
    %10 = vsyncpa [#allocation3], 0
    %s11 = scalar_lea.sflag [#allocation3], 1
    %12 = vsyncpa %s11, 0
    %13 = vsyncpa [#allocation6], 0
    %14 = vsyncpa [#allocation4], 0
    %s15 = scalar_lea.sflag [#allocation4], 1
    %16 = vsyncpa %s15, 0
    loop: start=0, step=1, limit=4
    $region2: #{tpu_custom_call.1} parent=1 // loop_pre_header
      _
    $region3: #{tpu_custom_call.1} parent=1 // loop_header
      %s18 = sphi 0, %s22
      %p19 = scmp.ge.s32.totalorder %s18, 4
      %s28 = sphi 0, %s30
      %s31 = sphi 0, %s28
      %s32 = sphi 0, %s31
      %s48 = sphi 0, %s32
      %s52 = sphi 0, %s52
      %s54 = sphi 0, %s52
      %s55 = sphi 0, %s54
      %s69 = sphi 0, %s55
      %s73 = sphi 0, %s73
      %s75 = sphi 0, %s73
      %s76 = sphi 0, %s75
      %s90 = sphi 0, %s76
      %s94 = sphi 0, %s94
      %s96 = sphi 0, %s94
      %s97 = sphi 0, %s96
      %s111 = sphi 0, %s97
      %s115 = sphi 0, %s115
      %s117 = sphi 0, %s115
      %s118 = sphi 0, %s117
      %s132 = sphi 0, %s118
      %s138 = sphi 0, %s140
      %s141 = sphi 0, %s138
      %s142 = sphi 0, %s141
      %s158 = sphi 0, %s142
    $region4: #{tpu_custom_call.1} parent=1 // loop_header_branch
      %21 = sbr.rel (%p19) target = $region8
    $region5: #{tpu_custom_call.1} parent=1 // loop_body
      %s23 = ssub.s32 %s18, 1
      %s24 = ssub.s32 %s18, 2
      %s25 = sadd.s32 %s18, 1
      %s26 = ssub.s32 %s18, %s25
      %p27 = scmp.eq.s32.totalorder %s26, 0
      %s29 = sadd.s32 %s28, 1
      %s30 = scalar_select %p27, %s28, %s29
      %p33 = pneg %p27
      %p34 = scmp.eq.s32.totalorder %s18, 1
      %p35 = por %p33, %p34
      %p36 = scmp.ne.s32.totalorder %s28, %s31
      %p37 = scmp.eq.s32.totalorder %s18, 0
      %p38 = por %p36, %p37
      %p39 = scmp.ne.s32.totalorder %s28, %s31
      %p40 = scmp.eq.s32.totalorder %s23, 1
      %p41 = por %p39, %p40
      %p42 = scmp.ne.s32.totalorder %s31, %s32
      %p43 = scmp.eq.s32.totalorder %s23, 0
      %p44 = por %p42, %p43
      %p45 = scmp.ne.s32.totalorder %s31, %s32
      %p46 = scmp.eq.s32.totalorder %s24, 1
      %p47 = por %p45, %p46
      %p49 = scmp.ne.s32.totalorder %s32, %s48
      %p50 = scmp.eq.s32.totalorder %s24, 0
      %p51 = por %p49, %p50
      %s53 = sadd.s32 %s52, 1
      %p56 = scmp.eq.s32.totalorder %s18, 1
      %p57 = scmp.ne.s32.totalorder %s52, %s54
      %p58 = scmp.eq.s32.totalorder %s18, 0
      %p59 = por %p57, %p58
      %p60 = scmp.ne.s32.totalorder %s52, %s54
      %p61 = scmp.eq.s32.totalorder %s23, 1
      %p62 = por %p60, %p61
      %p63 = scmp.ne.s32.totalorder %s54, %s55
      %p64 = scmp.eq.s32.totalorder %s23, 0
      %p65 = por %p63, %p64
      %p66 = scmp.ne.s32.totalorder %s54, %s55
      %p67 = scmp.eq.s32.totalorder %s24, 1
      %p68 = por %p66, %p67
      %p70 = scmp.ne.s32.totalorder %s55, %s69
      %p71 = scmp.eq.s32.totalorder %s24, 0
      %p72 = por %p70, %p71
      %s74 = sadd.s32 %s73, 1
      %p77 = scmp.eq.s32.totalorder %s18, 1
      %p78 = scmp.ne.s32.totalorder %s73, %s75
      %p79 = scmp.eq.s32.totalorder %s18, 0
      %p80 = por %p78, %p79
      %p81 = scmp.ne.s32.totalorder %s73, %s75
      %p82 = scmp.eq.s32.totalorder %s23, 1
      %p83 = por %p81, %p82
      %p84 = scmp.ne.s32.totalorder %s75, %s76
      %p85 = scmp.eq.s32.totalorder %s23, 0
      %p86 = por %p84, %p85
      %p87 = scmp.ne.s32.totalorder %s75, %s76
      %p88 = scmp.eq.s32.totalorder %s24, 1
      %p89 = por %p87, %p88
      %p91 = scmp.ne.s32.totalorder %s76, %s90
      %p92 = scmp.eq.s32.totalorder %s24, 0
      %p93 = por %p91, %p92
      %s95 = sadd.s32 %s94, 1
      %p98 = scmp.eq.s32.totalorder %s18, 1
      %p99 = scmp.ne.s32.totalorder %s94, %s96
      %p100 = scmp.eq.s32.totalorder %s18, 0
      %p101 = por %p99, %p100
      %p102 = scmp.ne.s32.totalorder %s94, %s96
      %p103 = scmp.eq.s32.totalorder %s23, 1
      %p104 = por %p102, %p103
      %p105 = scmp.ne.s32.totalorder %s96, %s97
      %p106 = scmp.eq.s32.totalorder %s23, 0
      %p107 = por %p105, %p106
      %p108 = scmp.ne.s32.totalorder %s96, %s97
      %p109 = scmp.eq.s32.totalorder %s24, 1
      %p110 = por %p108, %p109
      %p112 = scmp.ne.s32.totalorder %s97, %s111
      %p113 = scmp.eq.s32.totalorder %s24, 0
      %p114 = por %p112, %p113
      %s116 = sadd.s32 %s115, 1
      %p119 = scmp.eq.s32.totalorder %s18, 1
      %p120 = scmp.ne.s32.totalorder %s115, %s117
      %p121 = scmp.eq.s32.totalorder %s18, 0
      %p122 = por %p120, %p121
      %p123 = scmp.ne.s32.totalorder %s115, %s117
      %p124 = scmp.eq.s32.totalorder %s23, 1
      %p125 = por %p123, %p124
      %p126 = scmp.ne.s32.totalorder %s117, %s118
      %p127 = scmp.eq.s32.totalorder %s23, 0
      %p128 = por %p126, %p127
      %p129 = scmp.ne.s32.totalorder %s117, %s118
      %p130 = scmp.eq.s32.totalorder %s24, 1
      %p131 = por %p129, %p130
      %p133 = scmp.ne.s32.totalorder %s118, %s132
      %p134 = scmp.eq.s32.totalorder %s24, 0
      %p135 = por %p133, %p134
      %s136 = ssub.s32 %s18, %s25
      %p137 = scmp.eq.s32.totalorder %s136, 0
      %s139 = sadd.s32 %s138, 1
      %s140 = scalar_select %p137, %s138, %s139
      %p143 = pneg %p137
      %p144 = scmp.eq.s32.totalorder %s18, 1
      %p145 = por %p143, %p144
      %p146 = scmp.ne.s32.totalorder %s138, %s141
      %p147 = scmp.eq.s32.totalorder %s18, 0
      %p148 = por %p146, %p147
      %p149 = scmp.ne.s32.totalorder %s138, %s141
      %p150 = scmp.eq.s32.totalorder %s23, 1
      %p151 = por %p149, %p150
      %p152 = scmp.ne.s32.totalorder %s141, %s142
      %p153 = scmp.eq.s32.totalorder %s23, 0
      %p154 = por %p152, %p153
      %p155 = scmp.ne.s32.totalorder %s141, %s142
      %p156 = scmp.eq.s32.totalorder %s24, 1
      %p157 = por %p155, %p156
      %p159 = scmp.ne.s32.totalorder %s142, %s158
      %p160 = scmp.eq.s32.totalorder %s24, 0
      %p161 = por %p159, %p160
      %p162 = scmp.le.s32.totalorder 1, %s18
      %p163 = scmp.lt.s32.totalorder %s18, 3
      %p164 = pnand %p162, %p163
      %p165 = pneg %p164
      // Predicated region
      $region9: #{tpu_custom_call.1} parent=5 // pred_check
        _
      $region10: #{tpu_custom_call.1} parent=5 // pred_check_branch
        %167 = sbr.rel (%p164) target = $region12
      $region11: #{tpu_custom_call.1} parent=5 // pred_region
        %s168 = ssub.s32 %s18, 1
        // Predicated region
        $region13: #{tpu_custom_call.1} parent=11 // pred_check
          %p169 = pneg %p65
        $region14: #{tpu_custom_call.1} parent=11 // pred_check_branch
          %171 = sbr.rel (%p169) target = $region16
        $region15: #{tpu_custom_call.1} parent=11 // pred_region
          %s173 = ssub.s32 512, 512
          %174 = vsyncadd [#allocation6], %s173
          %s175 = sshll.u32 [#allocation5], 4
          %s176 = int_to_ptr.vmem [resolvable:$true] %s175
          %181 = dma.hbm_to_vmem [thread:$0]  %s1, 512, %s176, [#allocation6], 64, 64, 4
        $region16: #{tpu_custom_call.1} parent=11 // pred_fallthru
          _
        // Predicated region
        $region17: #{tpu_custom_call.1} parent=11 // pred_check
          %p182 = pneg %p86
        $region18: #{tpu_custom_call.1} parent=11 // pred_check_branch
          %184 = sbr.rel (%p182) target = $region20
        $region19: #{tpu_custom_call.1} parent=11 // pred_region
          _
        $region20: #{tpu_custom_call.1} parent=11 // pred_fallthru
          _
        // Predicated region
        $region21: #{tpu_custom_call.1} parent=11 // pred_check
          %p185 = pneg %p107
        $region22: #{tpu_custom_call.1} parent=11 // pred_check_branch
          %187 = sbr.rel (%p185) target = $region24
        $region23: #{tpu_custom_call.1} parent=11 // pred_region
          _
        $region24: #{tpu_custom_call.1} parent=11 // pred_fallthru
          _
        // Predicated region
        $region25: #{tpu_custom_call.1} parent=11 // pred_check
          %p188 = pneg %p128
        $region26: #{tpu_custom_call.1} parent=11 // pred_check_branch
          %190 = sbr.rel (%p188) target = $region28
        $region27: #{tpu_custom_call.1} parent=11 // pred_region
          _
        $region28: #{tpu_custom_call.1} parent=11 // pred_fallthru
          _
      $region12: #{tpu_custom_call.1} parent=5 // pred_fallthru
        _
      %p191 = scmp.lt.s32.totalorder %s18, 2
      // Predicated region
      $region29: #{tpu_custom_call.1} parent=5 // pred_check
        %p192 = pneg %p191
      $region30: #{tpu_custom_call.1} parent=5 // pred_check_branch
        %194 = sbr.rel (%p192) target = $region32
      $region31: #{tpu_custom_call.1} parent=5 // pred_region
        // Predicated region
        $region33: #{tpu_custom_call.1} parent=31 // pred_check
          %p195 = pneg %p38
        $region34: #{tpu_custom_call.1} parent=31 // pred_check_branch
          %197 = sbr.rel (%p195) target = $region36
        $region35: #{tpu_custom_call.1} parent=31 // pred_region
          %s198 = sand.u32 %s28, 1
          %s199 = scalar_lea.sflag [#allocation3], %s198
          %s200 = sand.u32 %s28, 1
          %s201 = smul.addr %s200, 8
          %s202 = scalar_lea.vmem [#allocation2], %s201
          %s203 = smul.u32 2, %s18
          %s205 = ssub.s32 128, 128
          %206 = vsyncadd %s199, %s205
          %s207 = smul.addr %s203, 64
          %s208 = scalar_lea.hbm %s0, %s207
          %s209 = sshll.u32 %s202, 4
          %s210 = int_to_ptr.vmem [resolvable:$true] %s209
          %215 = dma.hbm_to_vmem [thread:$0]  %s208, 128, %s210, %s199, 64, 64, 4
        $region36: #{tpu_custom_call.1} parent=31 // pred_fallthru
          _
      $region32: #{tpu_custom_call.1} parent=5 // pred_fallthru
        _
      %p216 = scmp.le.s32.totalorder 1, %s18
      %p217 = scmp.lt.s32.totalorder %s18, 3
      %p218 = pnand %p216, %p217
      %p219 = pneg %p218
      // Predicated region
      $region37: #{tpu_custom_call.1} parent=5 // pred_check
        _
      $region38: #{tpu_custom_call.1} parent=5 // pred_check_branch
        %221 = sbr.rel (%p218) target = $region40
      $region39: #{tpu_custom_call.1} parent=5 // pred_region
        %s222 = ssub.s32 %s18, 1
        %s223 = sand.u32 %s31, 1
        %s224 = scalar_lea.sflag [#allocation3], %s223
        %s225 = sand.u32 %s31, 1
        %s226 = smul.addr %s225, 8
        %s227 = scalar_lea.vmem [#allocation2], %s226
        // Predicated region
        $region41: #{tpu_custom_call.1} parent=39 // pred_check
          %p228 = pneg %p44
        $region42: #{tpu_custom_call.1} parent=39 // pred_check_branch
          %230 = sbr.rel (%p228) target = $region44
        $region43: #{tpu_custom_call.1} parent=39 // pred_region
          %231 = dma.done %s224, 128
        $region44: #{tpu_custom_call.1} parent=39 // pred_fallthru
          _
        // Predicated region
        $region45: #{tpu_custom_call.1} parent=39 // pred_check
          %p232 = pneg %p65
        $region46: #{tpu_custom_call.1} parent=39 // pred_check_branch
          %234 = sbr.rel (%p232) target = $region48
        $region47: #{tpu_custom_call.1} parent=39 // pred_region
          %235 = dma.done [#allocation6], 512
        $region48: #{tpu_custom_call.1} parent=39 // pred_fallthru
          _
        %s236 = sand.u32 %s31, 1
        %s237 = scalar_lea.sflag [#allocation3], %s236
        %s238 = sand.u32 %s31, 1
        %s239 = smul.addr %s238, 8
        %s240 = scalar_lea.vmem [#allocation2], %s239
        %p241 = pneg %p44
        %p242 = pneg %p41
        %p243 = pneg %p65
        %p244 = pneg %p62
        %p245 = pneg %p86
        %p246 = pneg %p83
        %p247 = pneg %p107
        %p248 = pneg %p104
        %p249 = pneg %p128
        %p250 = pneg %p125
        %p251 = pneg %p154
        %p252 = pneg %p151
        %s253 = sand.u32 %s141, 1
        %s254 = scalar_lea.sflag [#allocation4], %s253
        %s255 = sand.u32 %s141, 1
        %s256 = smul.addr %s255, 8
        %s257 = scalar_lea.vmem [#allocation7], %s256
        %s258 = smul.u32 2, %s23
        %s259 = smul.u32 2, %s23
        %v261 = vld [vmem:[%s227] sm:$0xf]
        %v262 = vld [vmem:[%s227 + $0x4] sm:$0xf]
        %v263 = vld [vmem:[#allocation5] sm:$0xf]
        %v264 = vld [vmem:[#allocation5 + $0x4] sm:$0xf]
        %v265 = vld [vmem:[#allocation5 + $0x8] sm:$0xf]
        %v266 = vld [vmem:[#allocation5 + $0xc] sm:$0xf]
        %v267 = vld [vmem:[#allocation5 + $0x10] sm:$0xf]
        %v268 = vld [vmem:[#allocation5 + $0x14] sm:$0xf]
        %v269 = vld [vmem:[#allocation5 + $0x18] sm:$0xf]
        %v270 = vld [vmem:[#allocation5 + $0x1c] sm:$0xf]
        %v271 = vld [vmem:[%s2] sm:$0x1]
        %v273 = vlaneseq
        %v274 = vshrl.u32 %v273, 7
        %v275 = vsub.s32 0, %v274
        %v276 = vrot.slane %v271, %v275
        %v280 = vunpack.c.l.b16 %v261
        %v281 = vunpack.c.l.b16 %v262
        %v282 = vpack.c.b16 %v281, %v280
        %v291 = vunpack.c.l.b16 %v263
        %v292 = vunpack.c.l.b16 %v264
        %v293 = vunpack.c.l.b16 %v265
        %v294 = vunpack.c.l.b16 %v266
        %v295 = vunpack.c.l.b16 %v267
        %v296 = vunpack.c.l.b16 %v268
        %v297 = vunpack.c.l.b16 %v269
        %v298 = vunpack.c.l.b16 %v270
        %v299 = vpack.c.b16 %v292, %v291
        %v300 = vpack.c.b16 %v294, %v293
        %v301 = vpack.c.b16 %v296, %v295
        %v302 = vpack.c.b16 %v298, %v297
        %vm307 = vcmask 523264
        %v309 = vsel %vm307, %v282, 0
        %311 = vmatprep.subr.bf16.mxu0 0
        %312 = vmatpush1.bf16.msra.mxu0 0
        %313 = vmatprep.subr.bf16.mxu0 0
        %314 = vmatpush1.bf16.msra.mxu0 0
        %315 = vmatprep.subr.bf16.mxu0 0
        %316 = vmatpush1.bf16.msra.mxu0 0
        %317 = vmatprep.subr.bf16.mxu0 0
        %318 = vmatpush1.bf16.msra.mxu0 0
        %319 = vmatprep.subr.bf16.mxu0 0
        %320 = vmatpush1.bf16.msra.mxu0 %v302
        %321 = vmatprep.subr.bf16.mxu0 0
        %322 = vmatpush1.bf16.msra.mxu0 %v301
        %323 = vmatprep.subr.bf16.mxu0 0
        %324 = vmatpush1.bf16.msra.mxu0 %v300
        %325 = vmatprep.subr.bf16.mxu0 0
        %326 = vmatpush1.bf16.msra.mxu0 %v299
        %327 = vmatprep.subr.bf16.mxu0 0
        %328 = vmatpush2.bf16.msra.mxu0 0
        %329 = vmatprep.subr.bf16.mxu0 0
        %330 = vmatpush2.bf16.msra.mxu0 0
        %331 = vmatprep.subr.bf16.mxu0 0
        %332 = vmatpush2.bf16.msra.mxu0 0
        %333 = vmatprep.subr.bf16.mxu0 0
        %334 = vmatpush2.bf16.msra.mxu0 0
        %335 = vmatprep.subr.bf16.mxu0 0
        %336 = vmatpush2.bf16.msra.mxu0 0
        %337 = vmatprep.subr.bf16.mxu0 0
        %338 = vmatpush2.bf16.msra.mxu0 0
        %339 = vmatprep.subr.bf16.mxu0 0
        %340 = vmatpush2.bf16.msra.mxu0 0
        %341 = vmatprep.subr.bf16.mxu0 0
        %342 = vmatpush2.bf16.msra.mxu0 0
        %343 = vmatprep.mubr.bf16.mxu0 0
        %344 = vmatmul.mubr.bf16.gmra.mxu0 %v309
        %v345 = vpop.f32.mrf.mxu0
        %v346 = vadd.f32 %v276, %v345
        %v347 = vpop.f32.mrf.mxu0
        %v348 = vpop.f32.mrf.mxu0
        %v349 = vadd.f32 %v276, %v348
        %v350 = vpop.f32.mrf.mxu0
        %351 = vdwg.mxu0
        %352 = vadd.xlane.f32.xlu0 %v346
        %v353 = vpop.xlane.xlu0 %352
        %354 = vadd.xlane.f32.xlu0 %v349
        %v355 = vpop.xlane.xlu0 %354
        %v356 = vmul.f32 %v346, %v346
        %v357 = vmul.f32 %v349, %v349
        %358 = vadd.xlane.f32.xlu0 %v356
        %v359 = vpop.xlane.xlu0 %358
        %360 = vadd.xlane.f32.xlu0 %v357
        %v361 = vpop.xlane.xlu0 %360
        %v362 = vmul.f32 %v353, 0.010416667
        %v363 = vmul.f32 %v355, 0.010416667
        %v364 = vmul.f32 %v359, 0.010416667
        %v365 = vmul.f32 %v361, 0.010416667
        %v366 = vmul.f32 %v362, %v362
        %v367 = vmul.f32 %v363, %v363
        %v368 = vsub.f32 %v364, %v366
        %v369 = vsub.f32 %v365, %v367
        %v370 = vmax.f32 %v368, 0.0
        %v371 = vmax.f32 %v369, 0.0
        %v372 = vsub.f32 %v346, %v362
        %v373 = vsub.f32 %v349, %v363
        %v374 = vadd.f32 %v370, 1e-05
        %v375 = vadd.f32 %v371, 1e-05
        %v376 = vrsqrt.pop %v374
        %v377 = vrsqrt.pop %v375
        %v378 = vmul.f32 %v372, %v376
        %v379 = vmul.f32 %v373, %v377
        %v380 = vld [vmem:[%s3] sm:$0x1]
        %v382 = vlaneseq
        %v383 = vshrl.u32 %v382, 7
        %v384 = vsub.s32 0, %v383
        %v385 = vrot.slane %v380, %v384
        %v387 = vmul.f32 %v378, %v385
        %v388 = vmul.f32 %v379, %v385
        %v389 = vld [vmem:[%s4] sm:$0x1]
        %v391 = vlaneseq
        %v392 = vshrl.u32 %v391, 7
        %v393 = vsub.s32 0, %v392
        %v394 = vrot.slane %v389, %v393
        %v396 = vadd.f32 %v387, %v394
        %v397 = vadd.f32 %v388, %v394
        %v398 = vpack.c.bf16 %v397, %v396
        %v400 = vunpack.c.l.b16 %v398
        %v401 = vunpack.c.h.b16 %v398
        %v402 = vpack.c.b16 %v400, %v400
        %v403 = vpack.c.b16 %v401, %v401
        %406 = vst [vmem:[%s257] sm:$0xf] %v402
        %407 = vst [vmem:[%s257 + $0x4] sm:$0xf] %v403
        %s408 = sand.u32 %s141, 1
        %s409 = scalar_lea.sflag [#allocation4], %s408
        %s410 = sand.u32 %s141, 1
        %s411 = smul.addr %s410, 8
        %s412 = scalar_lea.vmem [#allocation7], %s411
        // Predicated region
        $region49: #{tpu_custom_call.1} parent=39 // pred_check
          %p413 = pneg %p151
        $region50: #{tpu_custom_call.1} parent=39 // pred_check_branch
          %415 = sbr.rel (%p413) target = $region52
        $region51: #{tpu_custom_call.1} parent=39 // pred_region
          %s416 = smul.u32 2, %s23
          %s418 = ssub.s32 128, 128
          %419 = vsyncadd %s409, %s418
          %s420 = smul.addr %s416, 64
          %s421 = scalar_lea.hbm %s5, %s420
          %s422 = sshll.u32 %s412, 4
          %s423 = int_to_ptr.vmem [resolvable:$true] %s422
          %428 = dma.vmem_to_hbm [thread:$0]  %s423, 128, %s421, %s409, 64, 64, 4
        $region52: #{tpu_custom_call.1} parent=39 // pred_fallthru
          _
      $region40: #{tpu_custom_call.1} parent=5 // pred_fallthru
        _
      %p429 = scmp.le.s32.totalorder 2, %s18
      // Predicated region
      $region53: #{tpu_custom_call.1} parent=5 // pred_check
        %p430 = pneg %p429
      $region54: #{tpu_custom_call.1} parent=5 // pred_check_branch
        %432 = sbr.rel (%p430) target = $region56
      $region55: #{tpu_custom_call.1} parent=5 // pred_region
        %s433 = ssub.s32 %s18, 2
        // Predicated region
        $region57: #{tpu_custom_call.1} parent=55 // pred_check
          %p434 = pneg %p157
        $region58: #{tpu_custom_call.1} parent=55 // pred_check_branch
          %436 = sbr.rel (%p434) target = $region60
        $region59: #{tpu_custom_call.1} parent=55 // pred_region
          %s437 = sand.u32 %s142, 1
          %s438 = scalar_lea.sflag [#allocation4], %s437
          %s439 = sand.u32 %s142, 1
          %s440 = smul.addr %s439, 8
          %s441 = scalar_lea.vmem [#allocation7], %s440
          %442 = dma.done %s438, 128
        $region60: #{tpu_custom_call.1} parent=55 // pred_fallthru
          _
      $region56: #{tpu_custom_call.1} parent=5 // pred_fallthru
        _
    $region6: #{tpu_custom_call.1} parent=1 // loop_footer
      %s22 = sadd.s32 1, %s18
    $region7: #{tpu_custom_call.1} parent=1 // loop_footer_branch
      %17 = sbr.rel target = $region3
    $region8: #{tpu_custom_call.1} parent=1 // loop_exit
      _
    %443 = vsyncpa [#allocation3], 1
    %s444 = scalar_lea.sflag [#allocation3], 1
    %445 = vsyncpa %s444, 1
    %446 = vsyncpa [#allocation6], 1
    %447 = vsyncpa [#allocation4], 1
    %s448 = scalar_lea.sflag [#allocation4], 1
    %449 = vsyncpa %s448, 1

</llo_original>
